<compile_context>
chip_gen: v7x
topology: tpu7x:2x2x1
jax: 0.10.0
libtpu: 0.0.40
codegen_flags: <defaults>
</compile_context>

<pallas_src>
import functools

import jax
import jax.numpy as jnp
from jax.experimental import pallas as pl
from jax.experimental.pallas import tpu as pltpu


def _rmsnorm_kernel(x_ref, g_ref, o_ref, *, eps):
    # x_ref: (block_rows, dim) tile; g_ref: (1, dim) gamma * sqrt(dim)
    x = x_ref[...].astype(jnp.float32)
    sumsq = jnp.sum(x * x, axis=-1, keepdims=True)
    # x / max(||x||, eps)  ==  x * rsqrt(max(sumsq, eps^2))  (sqrt is monotone;
    # eps^2 = 1e-24 is a normal f32).  rsqrt runs on the EUP slot.
    inv = jax.lax.rsqrt(jnp.maximum(sumsq, eps * eps))
    g = g_ref[...].astype(jnp.float32)  # (1, dim) broadcasts over rows
    o_ref[...] = (x * inv * g).astype(o_ref.dtype)


def _choose_block_rows(rows, dim, itemsize, target_block_bytes):
    """Largest sublane-aligned row-tile that keeps one block <= budget."""
    # Sub-32-bit dtypes pack along sublanes: f32 -> 8, bf16 -> 16, int8 -> 32.
    sublane = max(8, 32 // max(itemsize, 1))
    br = target_block_bytes // max(dim * itemsize, 1)
    br = max(sublane, min(int(br), 4096))
    br = (br // sublane) * sublane
    # Don't allocate a block far bigger than the whole problem.
    rows_rounded = pl.cdiv(rows, sublane) * sublane
    return max(sublane, min(br, rows_rounded))


def rmsnorm_pallas(x, gamma, *, eps=1e-12, block_rows=None,
                   target_block_bytes=8 << 20):
    """x: (..., dim), gamma: (dim,). Returns same shape/dtype as x."""
    orig_shape = x.shape
    dim = orig_shape[-1]

    x2d = x.reshape(-1, dim)
    rows = x2d.shape[0]
    itemsize = jnp.dtype(x.dtype).itemsize

    if block_rows is None:
        block_rows = _choose_block_rows(rows, dim, itemsize, target_block_bytes)

    # Fold sqrt(dim) into gamma once (O(dim) host-side instead of O(rows*dim)
    # per grid step inside the kernel).
    g2d = (gamma.astype(jnp.float32) * (float(dim) ** 0.5)).reshape(1, dim)

    grid = (pl.cdiv(rows, block_rows),)

    # Double-buffered input + output blocks + gamma + slack; keep below v7x's
    # 64 MiB physical VMEM while lifting the default scoped limit.
    block_bytes = block_rows * dim * itemsize
    vmem_limit = int(min(max(4 * block_bytes + dim * 4 + (2 << 20), 32 << 20),
                         56 << 20))

    kernel = functools.partial(_rmsnorm_kernel, eps=eps)

    out = pl.pallas_call(
        kernel,
        out_shape=jax.ShapeDtypeStruct((rows, dim), x.dtype),
        grid_spec=pltpu.PrefetchScalarGridSpec(
            num_scalar_prefetch=0,
            grid=grid,
            in_specs=[
                pl.BlockSpec((block_rows, dim), lambda i: (i, 0)),
                pl.BlockSpec((1, dim), lambda i: (0, 0)),
            ],
            out_specs=pl.BlockSpec((block_rows, dim), lambda i: (i, 0)),
        ),
        compiler_params=pltpu.CompilerParams(
            dimension_semantics=("parallel",),
            vmem_limit_bytes=vmem_limit,
        ),
    )(x2d, g2d)

    return out.reshape(orig_shape)


def rmsnorm_reference(x, gamma, eps=1e-12):
    xf = x.astype(jnp.float32)
    dim = x.shape[-1]
    norm = jnp.sqrt(jnp.sum(xf * xf, axis=-1, keepdims=True))
    y = xf / jnp.maximum(norm, eps) * (dim ** 0.5) * gamma.astype(jnp.float32)
    return y.astype(x.dtype)


if __name__ == "__main__":
    key = jax.random.PRNGKey(0)
    k1, k2 = jax.random.split(key)

    batch, seq, dim = 2, 8, 32
    x = jax.random.normal(k1, (batch, seq, dim), dtype=jnp.float32)
    # Module init: gamma = ones(dim)  (deterministic)
    gamma = jnp.ones((dim,), dtype=jnp.float32)

    out = jax.block_until_ready(rmsnorm_pallas(x, gamma))
    ref = rmsnorm_reference(x, gamma)
    assert out.shape == x.shape and out.dtype == x.dtype
    assert jnp.allclose(out, ref, atol=1e-5, rtol=1e-5)

    # Exercise the ragged (partial last block) path: 15 rows, 8-row blocks.
    x2 = jax.random.normal(k2, (3, 5, dim), dtype=jnp.float32)
    out2 = jax.block_until_ready(rmsnorm_pallas(x2, gamma, block_rows=8))
    ref2 = rmsnorm_reference(x2, gamma)
    assert out2.shape == x2.shape
    assert jnp.allclose(out2, ref2, atol=1e-5, rtol=1e-5)

    print("KERNEL_OK")
</pallas_src>

<mosaic_0001>
module attributes {stable_mosaic.version = 11 : i64} {
  func.func @_rmsnorm_kernel(%arg0: i32, %arg1: memref<16x32xf32, #tpu.memory_space<vmem>>, %arg2: memref<1x32xf32, #tpu.memory_space<vmem>>, %arg3: memref<16x32xf32, #tpu.memory_space<vmem>>) attributes {dimension_semantics = [#tpu.dimension_semantics<parallel>], iteration_bounds = array<i64: 1>, scalar_prefetch = 0 : i64, scratch_operands = 0 : i64, tpu.core_type = #tpu.core_type<tc>, window_params = [{transform_indices = @transform_0, window_bounds = array<i64: 16, 32>}, {pipeline_mode = #tpu.pipeline_mode<synchronous>, transform_indices = @transform_1, window_bounds = array<i64: 1, 32>}, {transform_indices = @transform_2, window_bounds = array<i64: 16, 32>}]} {
    %c0 = arith.constant 0 : index
    %c0_0 = arith.constant 0 : index
    %0 = vector.load %arg1[%c0, %c0_0] : memref<16x32xf32, #tpu.memory_space<vmem>>, vector<16x32xf32>
    %1 = arith.mulf %0, %0 : vector<16x32xf32>
    %cst = arith.constant dense<0.000000e+00> : vector<16xf32>
    %2 = vector.multi_reduction <add>, %1, %cst [1] : vector<16x32xf32> to vector<16xf32>
    %3 = vector.shape_cast %2 : vector<16xf32> to vector<16x1xf32>
    %cst_1 = arith.constant 1.000000e-24 : f32
    %4 = vector.broadcast %cst_1 : f32 to vector<16x1xf32>
    %5 = arith.maximumf %3, %4 : vector<16x1xf32>
    %6 = math.rsqrt %5 : vector<16x1xf32>
    %c0_2 = arith.constant 0 : index
    %c0_3 = arith.constant 0 : index
    %7 = vector.load %arg2[%c0_2, %c0_3] : memref<1x32xf32, #tpu.memory_space<vmem>>, vector<1x32xf32>
    %8 = vector.broadcast %6 : vector<16x1xf32> to vector<16x32xf32>
    %9 = arith.mulf %0, %8 : vector<16x32xf32>
    %10 = vector.broadcast %7 : vector<1x32xf32> to vector<16x32xf32>
    %11 = arith.mulf %9, %10 : vector<16x32xf32>
    %c0_4 = arith.constant 0 : index
    %c0_5 = arith.constant 0 : index
    %12 = vector.load %arg3[%c0_4, %c0_5] : memref<16x32xf32, #tpu.memory_space<vmem>>, vector<16x32xf32>
    tpu.vector_store %arg3[%c0_4, %c0_5], %11 {strides = array<i32>} : memref<16x32xf32, #tpu.memory_space<vmem>>, vector<16x32xf32>,
    return
  }
  func.func @transform_0(%arg0: i32) -> (i32, i32) {
    %c0_i32 = arith.constant 0 : i32
    %c0_i32_0 = arith.constant 0 : i32
    return %arg0, %c0_i32 : i32, i32
  }
  func.func @transform_1(%arg0: i32) -> (i32, i32) {
    %c0_i32 = arith.constant 0 : i32
    %c0_i32_0 = arith.constant 0 : i32
    %c0_i32_1 = arith.constant 0 : i32
    return %c0_i32, %c0_i32_0 : i32, i32
  }
  func.func @transform_2(%arg0: i32) -> (i32, i32) {
    %c0_i32 = arith.constant 0 : i32
    %c0_i32_0 = arith.constant 0 : i32
    return %arg0, %c0_i32 : i32, i32
  }
}

</mosaic_0001>

<llo_original>
// kernel: tpu_custom_call.1
$region0: #{tpu_custom_call.1}
  #allocation0 [shape = 'u32[]', space=smem, size = 0x4, offset = 0x4, fixed_abs, tag = 'smem constant byte address 0x4 - core index']
  #allocation1 [shape = 'u32[144,128]{1,0:T(1,128)}', space=vmem, size = 0x12000, scoped, tag = 'internal scratch']
  %s0 = inlined_call_operand.hbm [shape: f32[16,32], index: 0, kind: input, shape index: {}]
  %s1 = inlined_call_operand.vmem [shape: f32[1,32], index: 1, kind: input, shape index: {}]
  %s2 = inlined_call_operand.hbm [shape: f32[16,32], index: 2, kind: output, shape index: {}]
  %s3 = sld [smem:[#allocation0]]
  $region22: #{tpu_custom_call.1} parent=0
    _
  %s5 = ssub.s32 1, %s3
  %s6 = scalar_select 0, %s5, %s3
  $region1: #{tpu_custom_call.1} parent=0
    #allocation2 [shape = 'u8[8192]{0}', space=vmem, size = 0x2000, scoped, tag = 'input window, operand 0, single buffered']
    #allocation3 [shape = 's32[1]{0}', space=sflag, size = 0x4, scoped, tag = 'scoped memory for tpu_custom_call.1']
    #allocation4 [shape = 's32[1]{0}', space=sflag, size = 0x4, scoped, tag = 'scoped memory for tpu_custom_call.1']
    #allocation5 [shape = 'u8[8192]{0}', space=vmem, size = 0x2000, scoped, tag = 'output window, operand 0, single buffered']
    %7 = vsyncpa [#allocation3], 0
    %8 = vsyncpa [#allocation4], 0
    // Predicated region
    $region2: #{tpu_custom_call.1} parent=1 // pred_check
      _
    $region3: #{tpu_custom_call.1} parent=1 // pred_check_branch
      %10 = sbr.rel (0) target = $region5
    $region4: #{tpu_custom_call.1} parent=1 // pred_region
      %s12 = ssub.s32 256, 256
      %13 = vsyncadd [#allocation3], %s12
      %s14 = sshll.u32 [#allocation2], 4
      %s15 = int_to_ptr.vmem [resolvable:$true] %s14
      %20 = dma.hbm_to_vmem [thread:$0]  %s0, 256, %s15, [#allocation3], 128, 128, 8
    $region5: #{tpu_custom_call.1} parent=1 // pred_fallthru
      _
    // Predicated region
    $region6: #{tpu_custom_call.1} parent=1 // pred_check
      _
    $region7: #{tpu_custom_call.1} parent=1 // pred_check_branch
      %22 = sbr.rel (0) target = $region9
    $region8: #{tpu_custom_call.1} parent=1 // pred_region
      _
    $region9: #{tpu_custom_call.1} parent=1 // pred_fallthru
      _
    // Predicated region
    $region10: #{tpu_custom_call.1} parent=1 // pred_check
      _
    $region11: #{tpu_custom_call.1} parent=1 // pred_check_branch
      %24 = sbr.rel (0) target = $region13
    $region12: #{tpu_custom_call.1} parent=1 // pred_region
      %25 = dma.done [#allocation3], 256
    $region13: #{tpu_custom_call.1} parent=1 // pred_fallthru
      _
    %v26 = vld [vmem:[#allocation2] sm:$0xff]
    %v27 = vld [vmem:[#allocation2 + $0x8] sm:$0xff]
    %v28 = vmul.f32 %v26, %v26
    %v29 = vmul.f32 %v27, %v27
    %vm30 = vcmask 261120
    %v31 = vsel %vm30, %v28, 0.0
    %32 = vadd.xlane.f32.xlu0 %v31
    %v33 = vpop.xlane.xlu0 %32
    %v34 = vsel %vm30, %v29, 0.0
    %35 = vadd.xlane.f32.xlu0 %v34
    %v36 = vpop.xlane.xlu0 %35
    %v37 = vmax.f32 %v33, 1e-24
    %v38 = vmax.f32 %v36, 1e-24
    %v39 = vrsqrt.pop %v37
    %v40 = vrsqrt.pop %v38
    %v41 = vld [vmem:[%s1] sm:$0x1]
    %v42 = vmul.f32 %v26, %v39
    %v43 = vmul.f32 %v27, %v40
    %v45 = vlaneseq
    %v46 = vshrl.u32 %v45, 7
    %v47 = vsub.s32 0, %v46
    %v48 = vrot.slane %v41, %v47
    %v50 = vmul.f32 %v42, %v48
    %v51 = vmul.f32 %v43, %v48
    %52 = vst.msk [vmem:[#allocation5] sm:$0xff] %vm30, %v50
    %53 = vst.msk [vmem:[#allocation5 + $0x8] sm:$0xff] %vm30, %v51
    // Predicated region
    $region14: #{tpu_custom_call.1} parent=1 // pred_check
      _
    $region15: #{tpu_custom_call.1} parent=1 // pred_check_branch
      %55 = sbr.rel (0) target = $region17
    $region16: #{tpu_custom_call.1} parent=1 // pred_region
      %s57 = ssub.s32 256, 256
      %58 = vsyncadd [#allocation4], %s57
      %s59 = sshll.u32 [#allocation5], 4
      %s60 = int_to_ptr.vmem [resolvable:$true] %s59
      %65 = dma.vmem_to_hbm [thread:$0]  %s60, 256, %s2, [#allocation4], 128, 128, 8
    $region17: #{tpu_custom_call.1} parent=1 // pred_fallthru
      _
    // Predicated region
    $region18: #{tpu_custom_call.1} parent=1 // pred_check
      _
    $region19: #{tpu_custom_call.1} parent=1 // pred_check_branch
      %67 = sbr.rel (0) target = $region21
    $region20: #{tpu_custom_call.1} parent=1 // pred_region
      %68 = dma.done [#allocation4], 256
    $region21: #{tpu_custom_call.1} parent=1 // pred_fallthru
      _
    %69 = vsyncpa [#allocation3], 1
    %70 = vsyncpa [#allocation4], 1

</llo_original>
